<compile_context>
chip_gen: v7x
topology: tpu7x:2x2x1
jax: 0.10.0
libtpu: 0.0.40
codegen_flags: <defaults>
</compile_context>

<pallas_src>
import jax
import jax.numpy as jnp
from jax.experimental import pallas as pl
from jax.experimental.pallas import tpu as pltpu


# ---------------------------------------------------------------------------
# Kernels
# ---------------------------------------------------------------------------
def _psnr_sq_err_kernel(img1_ref, img2_ref, out_ref):
    """Per-batch sum of squared differences, accumulated over the inner axis.

    img refs: (B, C, tile_hw) blocks (native dtype); out ref: (B, 1) f32
    partial sum for the current parallel chunk (resident across axis 1).
    """
    k = pl.program_id(1)

    @pl.when(k == 0)
    def _():
        out_ref[...] = jnp.zeros_like(out_ref)

    d = img1_ref[...].astype(jnp.float32) - img2_ref[...].astype(jnp.float32)
    sq = d * d                                     # (B, C, tile_hw)
    per_channel = jnp.sum(sq, axis=2)              # (B, C)   lane reduce
    out_ref[...] += jnp.sum(per_channel, axis=1, keepdims=True)  # (B, 1)


def _psnr_sq_err_masked_kernel(img1_ref, img2_ref, mask_ref, out_ref):
    """Masked variant.  mask_ref: (B, 1, tile_hw), broadcast over channels."""
    k = pl.program_id(1)

    @pl.when(k == 0)
    def _():
        out_ref[...] = jnp.zeros_like(out_ref)

    m = mask_ref[...].astype(jnp.float32)          # (B, 1, tile_hw)
    d = img1_ref[...].astype(jnp.float32) - img2_ref[...].astype(jnp.float32)
    d = m * d                                      # broadcast over channel dim
    sq = d * d                                     # (B, C, tile_hw)
    per_channel = jnp.sum(sq, axis=2)              # (B, C)
    out_ref[...] += jnp.sum(per_channel, axis=1, keepdims=True)  # (B, 1)


# ---------------------------------------------------------------------------
# Tiling plan / wrapper
# ---------------------------------------------------------------------------
def _round_up(x, m):
    return ((x + m - 1) // m) * m


def _vmem_caps():
    """(block working-set budget, vmem_limit_bytes), generation aware."""
    try:
        cap = int(pltpu.get_tpu_info().vmem_capacity_bytes)
    except Exception:
        cap = 64 << 20  # conservative: v7x per-TensorCore VMEM
    budget = max(8 << 20, min(cap // 2, 48 << 20))      # v7x: 32 MiB, v5e/v6e: 48 MiB
    vmem_limit = min(cap * 3 // 4, budget + (16 << 20))
    return budget, vmem_limit


def _plan_tiles(B, C, hw, in_itemsize, mask_itemsize, masked):
    """Pick tile width (in spatial elements) and the (parallel, reduce) grid."""
    budget, vmem_limit = _vmem_caps()
    c_pad = _round_up(max(C, 1), 8)        # sublane padding of the channel dim in VMEM

    # Approximate VMEM bytes per spatial element of one tile:
    #   2 image blocks, double-buffered (sublane padded)
    # + ~4 block-sized f32 temporaries inside the kernel
    # + double-buffered mask block (1 -> 8 sublanes) when masked.
    cost_per_hw = 2 * 2 * B * c_pad * in_itemsize + 4 * B * c_pad * 4
    if masked:
        cost_per_hw += 2 * B * 8 * mask_itemsize

    max_tile_units = max(1, (budget // cost_per_hw) // 128)   # in 128-lane units

    hw_units = pl.cdiv(hw, 128)
    n_steps = pl.cdiv(hw_units, max_tile_units)
    if hw_units >= 2:
        n_steps = max(n_steps, 2)          # allow 2-way split for v7x megacore
    if n_steps > 1 and n_steps % 2 == 1:
        n_steps += 1                       # even split across the parallel axis

    tile_units = pl.cdiv(hw_units, n_steps)
    tile_hw = tile_units * 128
    hw_pad = n_steps * tile_hw
    n_chunks = 2 if n_steps % 2 == 0 else 1
    k_per_chunk = n_steps // n_chunks
    return tile_hw, hw_pad, n_chunks, k_per_chunk, vmem_limit


def _pad_last(x, target):
    pad = target - x.shape[-1]
    if pad == 0:
        return x
    cfg = [(0, 0)] * (x.ndim - 1) + [(0, pad)]
    return jnp.pad(x, cfg)


def psnr(img1, img2, mask=None, epsilon=1e-07):
    """PSNR between img1 and img2, shape (B, C, H, W). Optional mask (B, 1, H, W)."""
    B, C, H, W = img1.shape
    hw = H * W
    n_total = C * hw
    masked = mask is not None

    in_itemsize = jnp.dtype(img1.dtype).itemsize
    mask_itemsize = jnp.dtype(mask.dtype).itemsize if masked else 0

    tile_hw, hw_pad, n_chunks, kpc, vmem_limit = _plan_tiles(
        B, C, hw, in_itemsize, mask_itemsize, masked)

    # Keep native dtype in HBM; the kernel casts to f32 per block.
    x1 = _pad_last(img1.reshape(B, C, hw), hw_pad)
    x2 = _pad_last(img2.reshape(B, C, hw), hw_pad)

    img_spec = pl.BlockSpec((B, C, tile_hw), lambda p, k: (0, 0, p * kpc + k))
    out_spec = pl.BlockSpec((None, B, 1), lambda p, k: (p, 0, 0))
    out_shape = jax.ShapeDtypeStruct((n_chunks, B, 1), jnp.float32)
    cparams = pltpu.CompilerParams(
        dimension_semantics=("parallel", "arbitrary"),
        vmem_limit_bytes=int(vmem_limit),
    )
    grid = (n_chunks, kpc)

    if not masked:
        partials = pl.pallas_call(
            _psnr_sq_err_kernel,
            out_shape=out_shape,
            grid_spec=pltpu.PrefetchScalarGridSpec(
                num_scalar_prefetch=0,
                grid=grid,
                in_specs=[img_spec, img_spec],
                out_specs=out_spec,
            ),
            compiler_params=cparams,
        )(x1, x2)
        sq_sum = jnp.sum(partials[:, :, 0], axis=0)          # (B,)
        mse = sq_sum / jnp.float32(n_total)
        return 10.0 * jnp.log10(1.0 / (jnp.float32(epsilon) + mse))

    # Masked path: stream the (B, 1, hw) mask tile; broadcast over channels
    # inside the kernel (no channel-replicated copy in HBM).
    m = _pad_last(mask.reshape(B, 1, hw), hw_pad)
    mask_spec = pl.BlockSpec((B, 1, tile_hw), lambda p, k: (0, 0, p * kpc + k))

    partials = pl.pallas_call(
        _psnr_sq_err_masked_kernel,
        out_shape=out_shape,
        grid_spec=pltpu.PrefetchScalarGridSpec(
            num_scalar_prefetch=0,
            grid=grid,
            in_specs=[img_spec, img_spec, mask_spec],
            out_specs=out_spec,
        ),
        compiler_params=cparams,
    )(x1, x2, m)

    sq_sum = jnp.sum(partials[:, :, 0], axis=0)               # (B,)
    mse = sq_sum / jnp.float32(n_total)
    # Tiny epilogue (B scalars) in the wrapper; mask normalization from the
    # original, unpadded mask.
    msum = jnp.sum(mask.astype(jnp.float32), axis=(1, 2, 3))
    factor = jnp.float32(hw) / msum
    return 10.0 * factor * jnp.log10(1.0 / (jnp.float32(epsilon) + mse))


# ---------------------------------------------------------------------------
# Reference (pure JAX) for a sanity check
# ---------------------------------------------------------------------------
def psnr_ref(img1, img2, mask=None, epsilon=1e-07):
    if mask is None:
        mse = jnp.mean((img1 - img2) ** 2, axis=(1, 2, 3))
        return 10.0 * jnp.log10(1.0 / (epsilon + mse))
    i1 = mask * img1
    i2 = mask * img2
    B, _, H, W = mask.shape
    factor = H * W / jnp.sum(mask, axis=(1, 2, 3))
    mse = jnp.mean((i1 - i2) ** 2, axis=(1, 2, 3))
    return 10.0 * factor * jnp.log10(1.0 / (epsilon + mse))


if __name__ == "__main__":
    key = jax.random.PRNGKey(0)
    k1, k2, k3 = jax.random.split(key, 3)

    B, C, H, W = 2, 4, 16, 16
    img1 = jax.random.uniform(k1, (B, C, H, W), dtype=jnp.float32)
    img2 = jax.random.uniform(k2, (B, C, H, W), dtype=jnp.float32)
    mask = (jax.random.uniform(k3, (B, 1, H, W)) > 0.3).astype(jnp.float32)

    out_plain = jax.block_until_ready(psnr(img1, img2))
    out_masked = jax.block_until_ready(psnr(img1, img2, mask=mask))

    ref_plain = psnr_ref(img1, img2)
    ref_masked = psnr_ref(img1, img2, mask=mask)

    assert jnp.allclose(out_plain, ref_plain, rtol=1e-4, atol=1e-4), (out_plain, ref_plain)
    assert jnp.allclose(out_masked, ref_masked, rtol=1e-4, atol=1e-4), (out_masked, ref_masked)

    print("KERNEL_OK")
</pallas_src>

<mosaic_0001>
module attributes {stable_mosaic.version = 11 : i64} {
  func.func @_psnr_sq_err_kernel(%arg0: i32, %arg1: i32, %arg2: memref<2x4x128xf32, #tpu.memory_space<vmem>>, %arg3: memref<2x4x128xf32, #tpu.memory_space<vmem>>, %arg4: memref<1x2x1xf32, #tpu.memory_space<vmem>>) attributes {dimension_semantics = [#tpu.dimension_semantics<parallel>, #tpu.dimension_semantics<arbitrary>], iteration_bounds = array<i64: 2, 1>, scalar_prefetch = 0 : i64, scratch_operands = 0 : i64, tpu.core_type = #tpu.core_type<tc>, window_params = [{transform_indices = @transform_0, window_bounds = array<i64: 2, 4, 128>}, {transform_indices = @transform_1, window_bounds = array<i64: 2, 4, 128>}, {transform_indices = @transform_2, window_bounds = array<i64: 1, 2, 1>}]} {
    %c0_i32 = arith.constant 0 : i32
    %0 = arith.cmpi eq, %arg1, %c0_i32 : i32
    %1 = arith.extui %0 : i1 to i32
    %c0_i32_0 = arith.constant 0 : i32
    %2 = arith.cmpi ne, %1, %c0_i32_0 : i32
    scf.if %2 {
      %cst_13 = arith.constant 0.000000e+00 : f32
      %16 = vector.broadcast %cst_13 : f32 to vector<2x1xf32>
      %c0_14 = arith.constant 0 : index
      %c0_15 = arith.constant 0 : index
      %c0_16 = arith.constant 0 : index
      %17 = vector.load %arg4[%c0_14, %c0_15, %c0_16] : memref<1x2x1xf32, #tpu.memory_space<vmem>>, vector<1x2x1xf32>
      %18 = vector.shape_cast %17 : vector<1x2x1xf32> to vector<2x1xf32>
      %19 = vector.shape_cast %16 : vector<2x1xf32> to vector<1x2x1xf32>
      tpu.vector_store %arg4[%c0_14, %c0_15, %c0_16], %19 {strides = array<i32>} : memref<1x2x1xf32, #tpu.memory_space<vmem>>, vector<1x2x1xf32>,
    } else {
    }
    %c0 = arith.constant 0 : index
    %c0_1 = arith.constant 0 : index
    %c0_2 = arith.constant 0 : index
    %3 = vector.load %arg2[%c0, %c0_1, %c0_2] : memref<2x4x128xf32, #tpu.memory_space<vmem>>, vector<2x4x128xf32>
    %c0_3 = arith.constant 0 : index
    %c0_4 = arith.constant 0 : index
    %c0_5 = arith.constant 0 : index
    %4 = vector.load %arg3[%c0_3, %c0_4, %c0_5] : memref<2x4x128xf32, #tpu.memory_space<vmem>>, vector<2x4x128xf32>
    %5 = arith.subf %3, %4 : vector<2x4x128xf32>
    %6 = arith.mulf %5, %5 : vector<2x4x128xf32>
    %cst = arith.constant dense<0.000000e+00> : vector<2x4xf32>
    %7 = vector.multi_reduction <add>, %6, %cst [2] : vector<2x4x128xf32> to vector<2x4xf32>
    %c0_6 = arith.constant 0 : index
    %c0_7 = arith.constant 0 : index
    %c0_8 = arith.constant 0 : index
    %8 = vector.load %arg4[%c0_6, %c0_7, %c0_8] : memref<1x2x1xf32, #tpu.memory_space<vmem>>, vector<1x2x1xf32>
    %9 = vector.shape_cast %8 : vector<1x2x1xf32> to vector<2x1xf32>
    %cst_9 = arith.constant dense<0.000000e+00> : vector<2xf32>
    %10 = vector.multi_reduction <add>, %7, %cst_9 [1] : vector<2x4xf32> to vector<2xf32>
    %11 = vector.shape_cast %10 : vector<2xf32> to vector<2x1xf32>
    %12 = arith.addf %9, %11 : vector<2x1xf32>
    %c0_10 = arith.constant 0 : index
    %c0_11 = arith.constant 0 : index
    %c0_12 = arith.constant 0 : index
    %13 = vector.load %arg4[%c0_10, %c0_11, %c0_12] : memref<1x2x1xf32, #tpu.memory_space<vmem>>, vector<1x2x1xf32>
    %14 = vector.shape_cast %13 : vector<1x2x1xf32> to vector<2x1xf32>
    %15 = vector.shape_cast %12 : vector<2x1xf32> to vector<1x2x1xf32>
    tpu.vector_store %arg4[%c0_10, %c0_11, %c0_12], %15 {strides = array<i32>} : memref<1x2x1xf32, #tpu.memory_space<vmem>>, vector<1x2x1xf32>,
    return
  }
  func.func @transform_0(%arg0: i32, %arg1: i32) -> (i32, i32, i32) {
    %c1_i32 = arith.constant 1 : i32
    %0 = arith.muli %arg0, %c1_i32 : i32
    %1 = arith.addi %0, %arg1 : i32
    %c0_i32 = arith.constant 0 : i32
    %c0_i32_0 = arith.constant 0 : i32
    %c0_i32_1 = arith.constant 0 : i32
    return %c0_i32, %c0_i32_0, %1 : i32, i32, i32
  }
  func.func @transform_1(%arg0: i32, %arg1: i32) -> (i32, i32, i32) {
    %c1_i32 = arith.constant 1 : i32
    %0 = arith.muli %arg0, %c1_i32 : i32
    %1 = arith.addi %0, %arg1 : i32
    %c0_i32 = arith.constant 0 : i32
    %c0_i32_0 = arith.constant 0 : i32
    %c0_i32_1 = arith.constant 0 : i32
    return %c0_i32, %c0_i32_0, %1 : i32, i32, i32
  }
  func.func @transform_2(%arg0: i32, %arg1: i32) -> (i32, i32, i32) {
    %c0_i32 = arith.constant 0 : i32
    %c0_i32_0 = arith.constant 0 : i32
    %c0_i32_1 = arith.constant 0 : i32
    return %arg0, %c0_i32, %c0_i32_0 : i32, i32, i32
  }
}

</mosaic_0001>

<llo_original>
// kernel: tpu_custom_call.1
$region0: #{tpu_custom_call.1}
  #allocation0 [shape = 'u32[]', space=smem, size = 0x4, offset = 0x4, fixed_abs, tag = 'smem constant byte address 0x4 - core index']
  #allocation1 [shape = 'u32[144,128]{1,0:T(1,128)}', space=vmem, size = 0x12000, scoped, tag = 'internal scratch']
  %s0 = inlined_call_operand.hbm [shape: f32[2,4,256], index: 0, kind: input, shape index: {}]
  %s1 = inlined_call_operand.hbm [shape: f32[2,4,256], index: 1, kind: input, shape index: {}]
  %s2 = inlined_call_operand.vmem [shape: f32[2,2,1], index: 2, kind: output, shape index: {}]
  %s3 = sld [smem:[#allocation0]]
  $region53: #{tpu_custom_call.1} parent=0
    _
  %s5 = ssub.s32 1, %s3
  %s6 = scalar_select 0, %s5, %s3
  $region1: #{tpu_custom_call.1} parent=0
    #allocation2 [shape = 'u8[8192]{0}', space=vmem, size = 0x2000, scoped, tag = 'input window, operand 0']
    #allocation3 [shape = 's32[2]{0}', space=sflag, size = 0x8, scoped, tag = 'scoped memory for tpu_custom_call.1']
    #allocation4 [shape = 'u8[8192]{0}', space=vmem, size = 0x2000, scoped, tag = 'input window, operand 1']
    #allocation5 [shape = 's32[2]{0}', space=sflag, size = 0x8, scoped, tag = 'scoped memory for tpu_custom_call.1']
    %7 = vsyncpa [#allocation3], 0
    %s8 = scalar_lea.sflag [#allocation3], 1
    %9 = vsyncpa %s8, 0
    %10 = vsyncpa [#allocation5], 0
    %s11 = scalar_lea.sflag [#allocation5], 1
    %12 = vsyncpa %s11, 0
    loop: start=0, step=1, limit=4
    $region2: #{tpu_custom_call.1} parent=1 // loop_pre_header
      _
    $region3: #{tpu_custom_call.1} parent=1 // loop_header
      %s14 = sphi 0, %s18
      %p15 = scmp.ge.s32.totalorder %s14, 4
      %s21 = sphi 0, %s33
      %s22 = sphi 0, %s29
      %s23 = sphi 0, %s21
      %s24 = sphi 0, %s22
      %s25 = sphi 0, %s23
      %s26 = sphi 0, %s24
      %s38 = sphi 0, %s40
      %s41 = sphi 0, %s38
      %s42 = sphi 0, %s41
      %s58 = sphi 0, %s42
      %s66 = sphi 0, %s68
      %s69 = sphi 0, %s66
      %s70 = sphi 0, %s69
      %s86 = sphi 0, %s70
      %s92 = sphi 0, %s94
      %s95 = sphi 0, %s92
      %s96 = sphi 0, %s95
      %s112 = sphi 0, %s96
    $region4: #{tpu_custom_call.1} parent=1 // loop_header_branch
      %17 = sbr.rel (%p15) target = $region8
    $region5: #{tpu_custom_call.1} parent=1 // loop_body
      %s19 = ssub.s32 %s14, 1
      %s20 = ssub.s32 %s14, 2
      %s27 = sadd.s32 1, %s22
      %p28 = scmp.ge.s32.totalorder %s27, 1
      %s29 = scalar_select %p28, 0, %s27
      %s30 = sadd.s32 1, %s21
      %s31 = scalar_select %p28, %s30, %s21
      %p32 = scmp.ge.s32.totalorder %s31, 2
      %s33 = scalar_select %p32, 0, %s31
      %s34 = sadd.s32 %s21, %s22
      %s35 = sadd.s32 %s33, %s29
      %s36 = ssub.s32 %s34, %s35
      %p37 = scmp.eq.s32.totalorder %s36, 0
      %s39 = sadd.s32 %s38, 1
      %s40 = scalar_select %p37, %s38, %s39
      %p43 = pneg %p37
      %p44 = scmp.eq.s32.totalorder %s14, 1
      %p45 = por %p43, %p44
      %p46 = scmp.ne.s32.totalorder %s38, %s41
      %p47 = scmp.eq.s32.totalorder %s14, 0
      %p48 = por %p46, %p47
      %p49 = scmp.ne.s32.totalorder %s38, %s41
      %p50 = scmp.eq.s32.totalorder %s19, 1
      %p51 = por %p49, %p50
      %p52 = scmp.ne.s32.totalorder %s41, %s42
      %p53 = scmp.eq.s32.totalorder %s19, 0
      %p54 = por %p52, %p53
      %p55 = scmp.ne.s32.totalorder %s41, %s42
      %p56 = scmp.eq.s32.totalorder %s20, 1
      %p57 = por %p55, %p56
      %p59 = scmp.ne.s32.totalorder %s42, %s58
      %p60 = scmp.eq.s32.totalorder %s20, 0
      %p61 = por %p59, %p60
      %s62 = sadd.s32 %s21, %s22
      %s63 = sadd.s32 %s33, %s29
      %s64 = ssub.s32 %s62, %s63
      %p65 = scmp.eq.s32.totalorder %s64, 0
      %s67 = sadd.s32 %s66, 1
      %s68 = scalar_select %p65, %s66, %s67
      %p71 = pneg %p65
      %p72 = scmp.eq.s32.totalorder %s14, 1
      %p73 = por %p71, %p72
      %p74 = scmp.ne.s32.totalorder %s66, %s69
      %p75 = scmp.eq.s32.totalorder %s14, 0
      %p76 = por %p74, %p75
      %p77 = scmp.ne.s32.totalorder %s66, %s69
      %p78 = scmp.eq.s32.totalorder %s19, 1
      %p79 = por %p77, %p78
      %p80 = scmp.ne.s32.totalorder %s69, %s70
      %p81 = scmp.eq.s32.totalorder %s19, 0
      %p82 = por %p80, %p81
      %p83 = scmp.ne.s32.totalorder %s69, %s70
      %p84 = scmp.eq.s32.totalorder %s20, 1
      %p85 = por %p83, %p84
      %p87 = scmp.ne.s32.totalorder %s70, %s86
      %p88 = scmp.eq.s32.totalorder %s20, 0
      %p89 = por %p87, %p88
      %s90 = ssub.s32 %s21, %s33
      %p91 = scmp.eq.s32.totalorder %s90, 0
      %s93 = sadd.s32 %s92, 1
      %s94 = scalar_select %p91, %s92, %s93
      %p97 = pneg %p91
      %p98 = scmp.eq.s32.totalorder %s14, 1
      %p99 = por %p97, %p98
      %p100 = scmp.ne.s32.totalorder %s92, %s95
      %p101 = scmp.eq.s32.totalorder %s14, 0
      %p102 = por %p100, %p101
      %p103 = scmp.ne.s32.totalorder %s92, %s95
      %p104 = scmp.eq.s32.totalorder %s19, 1
      %p105 = por %p103, %p104
      %p106 = scmp.ne.s32.totalorder %s95, %s96
      %p107 = scmp.eq.s32.totalorder %s19, 0
      %p108 = por %p106, %p107
      %p109 = scmp.ne.s32.totalorder %s95, %s96
      %p110 = scmp.eq.s32.totalorder %s20, 1
      %p111 = por %p109, %p110
      %p113 = scmp.ne.s32.totalorder %s96, %s112
      %p114 = scmp.eq.s32.totalorder %s20, 0
      %p115 = por %p113, %p114
      %p116 = scmp.le.s32.totalorder 1, %s14
      %p117 = scmp.lt.s32.totalorder %s14, 3
      %p118 = pnand %p116, %p117
      %p119 = pneg %p118
      // Predicated region
      $region9: #{tpu_custom_call.1} parent=5 // pred_check
        _
      $region10: #{tpu_custom_call.1} parent=5 // pred_check_branch
        %121 = sbr.rel (%p118) target = $region12
      $region11: #{tpu_custom_call.1} parent=5 // pred_region
        %s122 = ssub.s32 %s14, 1
      $region12: #{tpu_custom_call.1} parent=5 // pred_fallthru
        _
      %p123 = scmp.lt.s32.totalorder %s14, 2
      // Predicated region
      $region13: #{tpu_custom_call.1} parent=5 // pred_check
        %p124 = pneg %p123
      $region14: #{tpu_custom_call.1} parent=5 // pred_check_branch
        %126 = sbr.rel (%p124) target = $region16
      $region15: #{tpu_custom_call.1} parent=5 // pred_region
        // Predicated region
        $region17: #{tpu_custom_call.1} parent=15 // pred_check
          %p127 = pneg %p48
        $region18: #{tpu_custom_call.1} parent=15 // pred_check_branch
          %129 = sbr.rel (%p127) target = $region20
        $region19: #{tpu_custom_call.1} parent=15 // pred_region
          %s130 = sand.u32 %s38, 1
          %s131 = scalar_lea.sflag [#allocation3], %s130
          %s132 = sand.u32 %s38, 1
          %s133 = smul.addr %s132, 8
          %s134 = scalar_lea.vmem [#allocation2], %s133
          %s135 = sadd.s32 %s21, %s22
          %s137 = ssub.s32 128, 128
          %138 = vsyncadd %s131, %s137
          %s139 = smul.addr %s135, 64
          %s140 = scalar_lea.hbm %s0, %s139
          %s141 = sshll.u32 %s134, 4
          %s142 = int_to_ptr.vmem [resolvable:$true] %s141
          %147 = dma.hbm_to_vmem [thread:$0]  %s140, 128, %s142, %s131, 128, 64, 4
        $region20: #{tpu_custom_call.1} parent=15 // pred_fallthru
          _
        // Predicated region
        $region21: #{tpu_custom_call.1} parent=15 // pred_check
          %p148 = pneg %p76
        $region22: #{tpu_custom_call.1} parent=15 // pred_check_branch
          %150 = sbr.rel (%p148) target = $region24
        $region23: #{tpu_custom_call.1} parent=15 // pred_region
          %s151 = sand.u32 %s66, 1
          %s152 = scalar_lea.sflag [#allocation5], %s151
          %s153 = sand.u32 %s66, 1
          %s154 = smul.addr %s153, 8
          %s155 = scalar_lea.vmem [#allocation4], %s154
          %s156 = sadd.s32 %s21, %s22
          %s158 = ssub.s32 128, 128
          %159 = vsyncadd %s152, %s158
          %s160 = smul.addr %s156, 64
          %s161 = scalar_lea.hbm %s1, %s160
          %s162 = sshll.u32 %s155, 4
          %s163 = int_to_ptr.vmem [resolvable:$true] %s162
          %168 = dma.hbm_to_vmem [thread:$0]  %s161, 128, %s163, %s152, 128, 64, 4
        $region24: #{tpu_custom_call.1} parent=15 // pred_fallthru
          _
      $region16: #{tpu_custom_call.1} parent=5 // pred_fallthru
        _
      %p169 = scmp.le.s32.totalorder 1, %s14
      %p170 = scmp.lt.s32.totalorder %s14, 3
      %p171 = pnand %p169, %p170
      %p172 = pneg %p171
      // Predicated region
      $region25: #{tpu_custom_call.1} parent=5 // pred_check
        _
      $region26: #{tpu_custom_call.1} parent=5 // pred_check_branch
        %174 = sbr.rel (%p171) target = $region28
      $region27: #{tpu_custom_call.1} parent=5 // pred_region
        %s175 = ssub.s32 %s14, 1
        %s176 = sand.u32 %s41, 1
        %s177 = scalar_lea.sflag [#allocation3], %s176
        %s178 = sand.u32 %s41, 1
        %s179 = smul.addr %s178, 8
        %s180 = scalar_lea.vmem [#allocation2], %s179
        // Predicated region
        $region29: #{tpu_custom_call.1} parent=27 // pred_check
          %p181 = pneg %p54
        $region30: #{tpu_custom_call.1} parent=27 // pred_check_branch
          %183 = sbr.rel (%p181) target = $region32
        $region31: #{tpu_custom_call.1} parent=27 // pred_region
          %184 = dma.done %s177, 128
        $region32: #{tpu_custom_call.1} parent=27 // pred_fallthru
          _
        %s185 = sand.u32 %s69, 1
        %s186 = scalar_lea.sflag [#allocation5], %s185
        %s187 = sand.u32 %s69, 1
        %s188 = smul.addr %s187, 8
        %s189 = scalar_lea.vmem [#allocation4], %s188
        // Predicated region
        $region33: #{tpu_custom_call.1} parent=27 // pred_check
          %p190 = pneg %p82
        $region34: #{tpu_custom_call.1} parent=27 // pred_check_branch
          %192 = sbr.rel (%p190) target = $region36
        $region35: #{tpu_custom_call.1} parent=27 // pred_region
          %193 = dma.done %s186, 128
        $region36: #{tpu_custom_call.1} parent=27 // pred_fallthru
          _
        %s194 = sand.u32 %s41, 1
        %s195 = scalar_lea.sflag [#allocation3], %s194
        %s196 = sand.u32 %s41, 1
        %s197 = smul.addr %s196, 8
        %s198 = scalar_lea.vmem [#allocation2], %s197
        %p199 = pneg %p54
        %p200 = pneg %p51
        %s201 = sand.u32 %s69, 1
        %s202 = scalar_lea.sflag [#allocation5], %s201
        %s203 = sand.u32 %s69, 1
        %s204 = smul.addr %s203, 8
        %s205 = scalar_lea.vmem [#allocation4], %s204
        %p206 = pneg %p82
        %p207 = pneg %p79
        %p208 = pneg %p108
        %p209 = pneg %p105
        %p210 = scmp.lt.s32.totalorder %s23, 1
        %s211 = scalar_select %p210, %s23, 1
        %s212 = smul.addr %s211, 2
        %s213 = scalar_lea.vmem %s2, %s212
        %s214 = sadd.s32 %s23, %s24
        %s215 = sadd.s32 %s23, %s24
        %p216 = scmp.lt.s32.totalorder %s23, 1
        %s217 = scalar_select %p216, %s23, 1
        %s218 = smul.addr %s217, 2
        %s219 = scalar_lea.vmem %s2, %s218
        %p220 = scmp.eq.s32.totalorder %s24, 0
        // Predicated region
        $region37: #{tpu_custom_call.1} parent=27 // pred_check
          %p221 = pneg %p220
        $region38: #{tpu_custom_call.1} parent=27 // pred_check_branch
          %223 = sbr.rel (%p221) target = $region40
        $region39: #{tpu_custom_call.1} parent=27 // pred_region
          %vm224 = vcmask 1024
          %225 = vst.msk [vmem:[%s219] sm:$0x3] %vm224, 0.0
        $region40: #{tpu_custom_call.1} parent=27 // pred_fallthru
          _
        %v226 = vld [vmem:[%s180] sm:$0xf]
        %v227 = vld [vmem:[%s180 + $0x4] sm:$0xf]
        %v228 = vld [vmem:[%s189] sm:$0xf]
        %v229 = vld [vmem:[%s189 + $0x4] sm:$0xf]
        %v230 = vsub.f32 %v226, %v228
        %v231 = vsub.f32 %v227, %v229
        %v232 = vmul.f32 %v230, %v230
        %v233 = vmul.f32 %v231, %v231
        %vm234 = vcmask 1043456
        %v235 = vsel %vm234, %v232, 0.0
        %236 = vadd.xlane.f32.xlu0 %v235
        %v237 = vpop.xlane.xlu0 %236
        %v238 = vsel %vm234, %v233, 0.0
        %239 = vadd.xlane.f32.xlu0 %v238
        %v240 = vpop.xlane.xlu0 %239
        %v241 = vld [vmem:[%s219] sm:$0x3]
        %v244 = vlaneseq
        %v245 = vand.u32 %v244, 127
        %v246 = vlaneseq
        %v247 = vshrl.u32 %v246, 7
        %v248 = vsub.s32 %v245, %v247
        %v249 = vrot.slane %v237, %v248
        %v250 = vlaneseq
        %v251 = vshrl.u32 %v250, 7
        %v252 = vsub.s32 %v245, %v251
        %v253 = vrot.slane %v240, %v252
        %vm254 = vcmask 1041409
        %v255 = vsel %vm254, %v253, %v249
        %vm257 = vcmask 25600
        %v258 = vsel %vm257, %v255, 0.0
        %259 = vadd.xlane.f32.xlu0 %v258
        %v260 = vpop.xlane.xlu0 %259
        %v261 = vadd.f32 %v241, %v260
        %vm262 = vcmask 1024
        %263 = vst.msk [vmem:[%s219] sm:$0x3] %vm262, %v261
        %p264 = scmp.lt.s32.totalorder %s23, 1
        %s265 = scalar_select %p264, %s23, 1
        %s266 = smul.addr %s265, 2
        %s267 = scalar_lea.vmem %s2, %s266
        // Predicated region
        $region41: #{tpu_custom_call.1} parent=27 // pred_check
          %p268 = pneg %p105
        $region42: #{tpu_custom_call.1} parent=27 // pred_check_branch
          %270 = sbr.rel (%p268) target = $region44
        $region43: #{tpu_custom_call.1} parent=27 // pred_region
          _
        $region44: #{tpu_custom_call.1} parent=27 // pred_fallthru
          _
      $region28: #{tpu_custom_call.1} parent=5 // pred_fallthru
        _
      %p271 = scmp.le.s32.totalorder 2, %s14
      // Predicated region
      $region45: #{tpu_custom_call.1} parent=5 // pred_check
        %p272 = pneg %p271
      $region46: #{tpu_custom_call.1} parent=5 // pred_check_branch
        %274 = sbr.rel (%p272) target = $region48
      $region47: #{tpu_custom_call.1} parent=5 // pred_region
        %s275 = ssub.s32 %s14, 2
        // Predicated region
        $region49: #{tpu_custom_call.1} parent=47 // pred_check
          %p276 = pneg %p111
        $region50: #{tpu_custom_call.1} parent=47 // pred_check_branch
          %278 = sbr.rel (%p276) target = $region52
        $region51: #{tpu_custom_call.1} parent=47 // pred_region
          %p279 = scmp.lt.s32.totalorder %s25, 1
          %s280 = scalar_select %p279, %s25, 1
          %s281 = smul.addr %s280, 2
          %s282 = scalar_lea.vmem %s2, %s281
        $region52: #{tpu_custom_call.1} parent=47 // pred_fallthru
          _
      $region48: #{tpu_custom_call.1} parent=5 // pred_fallthru
        _
    $region6: #{tpu_custom_call.1} parent=1 // loop_footer
      %s18 = sadd.s32 1, %s14
    $region7: #{tpu_custom_call.1} parent=1 // loop_footer_branch
      %13 = sbr.rel target = $region3
    $region8: #{tpu_custom_call.1} parent=1 // loop_exit
      _
    %283 = vsyncpa [#allocation3], 1
    %s284 = scalar_lea.sflag [#allocation3], 1
    %285 = vsyncpa %s284, 1
    %286 = vsyncpa [#allocation5], 1
    %s287 = scalar_lea.sflag [#allocation5], 1
    %288 = vsyncpa %s287, 1

</llo_original>
